<compile_context>
chip_gen: v7x
topology: tpu7x:2x2x1
jax: 0.10.0
libtpu: 0.0.40
codegen_flags: <defaults>
</compile_context>

<pallas_src>
import numpy as np
import jax
import jax.numpy as jnp
from jax.experimental import pallas as pl
from jax.experimental.pallas import tpu as pltpu


def _gaussian_low_filter(H, W, D0=10.0):
    """Exactly mirrors guassian_low_high_pass_filter (center = ((H-1)//2, (W-1)//2))."""
    y, z = np.meshgrid(np.arange(H), np.arange(W), indexing="ij")
    c0, c1 = (H - 1) // 2, (W - 1) // 2
    d2 = (y - c0) ** 2 + (z - c1) ** 2
    return np.exp(-d2 / (2.0 * D0 ** 2))


def fsm_fft_kernel(x_ref, mr_ref, mi_ref, wa_ref, wc_ref, out_ref):
    f32 = jnp.float32
    x = x_ref[0]                                    # (C, H*W) f32, lane-dense
    xb = x.astype(jnp.bfloat16)

    # ---- fused fft2 -> Gaussian low-pass -> ifft2 (complex, split re/im) ----
    yr = jnp.dot(xb, mr_ref[...], preferred_element_type=f32)
    yi = jnp.dot(xb, mi_ref[...], preferred_element_type=f32)
    mag = jnp.sqrt(yr * yr + yi * yi)               # |ifft2(filtered)|, (C, H*W)

    # ---- avg_pool2d(H,W) -> 1x1 conv_atten -> sigmoid ----
    # linear ops reordered: mean_hw(w_atten @ mag) == w_atten @ mean_hw(mag)
    t = jnp.dot(wa_ref[...], mag, preferred_element_type=f32)   # (C, H*W)
    att = jax.nn.sigmoid(jnp.mean(t, axis=1, keepdims=True))    # (C, 1)

    # ---- x + x*atten, then 1x1 conv: (Cout,C) @ (C,H*W), lane-dense store ----
    x2 = x * (1.0 + att)
    out_ref[0] = jnp.dot(wc_ref[...], x2, preferred_element_type=f32)


def feature_selection_module_fft(x, w_atten, w_conv, D0=10.0):
    """x: (N, C, H, W) float32; w_atten: (C, C); w_conv: (Cout, C)."""
    N, C, H, W = x.shape
    Cout = w_conv.shape[0]
    HW = H * W

    # 1-D DFT / inverse-DFT matrices (complex128 on host).
    kh, kw = np.arange(H), np.arange(W)
    FH = np.exp(-2j * np.pi * np.outer(kh, kh) / H)
    FW = np.exp(-2j * np.pi * np.outer(kw, kw) / W)
    AH = np.conj(FH) / H
    AW = np.conj(FW) / W

    # Separable Gaussian low-pass, pre-ifftshifted into unshifted coordinates.
    gh = np.exp(-((np.arange(H) - (H - 1) // 2) ** 2) / (2.0 * D0 ** 2))
    gw = np.exp(-((np.arange(W) - (W - 1) // 2) ** 2) / (2.0 * D0 ** 2))
    gh_u = np.fft.ifftshift(gh)
    gw_u = np.fft.ifftshift(gw)

    # y2d = L @ x2d @ R  ==>  y_flat = x_flat @ kron(L.T, R)  (row-major flatten)
    L = AH @ np.diag(gh_u) @ FH
    R = FW @ np.diag(gw_u) @ AW
    M = np.kron(L.T, R)                             # (H*W, H*W) complex
    mr = jnp.asarray(np.real(M), jnp.bfloat16)
    mi = jnp.asarray(np.imag(M), jnp.bfloat16)

    wa = jnp.asarray(w_atten, jnp.float32)
    wc = jnp.asarray(w_conv, jnp.float32)

    x_flat = x.reshape(N, C, HW).astype(jnp.float32)

    out_flat = pl.pallas_call(
        fsm_fft_kernel,
        out_shape=jax.ShapeDtypeStruct((N, Cout, HW), jnp.float32),
        grid=(N,),
        in_specs=[
            pl.BlockSpec((1, C, HW), lambda n: (n, 0, 0)),
            pl.BlockSpec((HW, HW), lambda n: (0, 0)),
            pl.BlockSpec((HW, HW), lambda n: (0, 0)),
            pl.BlockSpec((C, C), lambda n: (0, 0)),
            pl.BlockSpec((Cout, C), lambda n: (0, 0)),
        ],
        out_specs=pl.BlockSpec((1, Cout, HW), lambda n: (n, 0, 0)),
        compiler_params=pltpu.CompilerParams(dimension_semantics=("parallel",)),
    )(x_flat, mr, mi, wa, wc)

    return out_flat.reshape(N, Cout, H, W)


def reference_forward(x, w_atten, w_conv, D0=10.0):
    """Pure-JAX reference mirroring the PyTorch module (low_flag=True)."""
    freq = jnp.fft.fft2(x)
    shift = jnp.fft.fftshift(freq)                  # all dims, like torch default
    H, W = x.shape[2], x.shape[3]
    low = jnp.asarray(_gaussian_low_filter(H, W, D0), jnp.float32)
    ishift = jnp.fft.ifftshift(shift * low)
    freq_x = jnp.abs(jnp.fft.ifft2(ishift)).astype(jnp.float32)
    pooled = jnp.mean(freq_x, axis=(2, 3))                          # (N, C)
    atten = jax.nn.sigmoid(pooled @ w_atten.T)[:, :, None, None]    # (N, C, 1, 1)
    x2 = x + x * atten
    return jnp.einsum("oc,nchw->nohw", w_conv, x2)


if __name__ == "__main__":
    key = jax.random.PRNGKey(0)
    k1, k2, k3 = jax.random.split(key, 3)
    N, C, H, W, Cout = 2, 4, 16, 16, 8

    x = jax.random.normal(k1, (N, C, H, W), jnp.float32)
    # kaiming_normal_(a=1) on 1x1 convs: std = sqrt(2 / ((1+a^2) * fan_in)) = 1/sqrt(C)
    w_atten = jax.random.normal(k2, (C, C), jnp.float32) / jnp.sqrt(1.0 * C)
    w_conv = jax.random.normal(k3, (Cout, C), jnp.float32) / jnp.sqrt(1.0 * C)

    out = feature_selection_module_fft(x, w_atten, w_conv)
    out = jax.block_until_ready(out)

    ref = reference_forward(x, w_atten, w_conv)
    assert out.shape == (N, Cout, H, W)
    # bf16 MXU operands (f32 accumulation) -> slightly looser tolerance.
    np.testing.assert_allclose(np.asarray(out), np.asarray(ref), rtol=1e-2, atol=1e-2)
    print("KERNEL_OK")
</pallas_src>

<mosaic_0001>
module attributes {stable_mosaic.version = 11 : i64} {
  func.func @fsm_fft_kernel(%arg0: i32, %arg1: memref<1x4x256xf32, #tpu.memory_space<vmem>>, %arg2: memref<256x256xbf16, #tpu.memory_space<vmem>>, %arg3: memref<256x256xbf16, #tpu.memory_space<vmem>>, %arg4: memref<4x4xf32, #tpu.memory_space<vmem>>, %arg5: memref<8x4xf32, #tpu.memory_space<vmem>>, %arg6: memref<1x8x256xf32, #tpu.memory_space<vmem>>) attributes {dimension_semantics = [#tpu.dimension_semantics<parallel>], iteration_bounds = array<i64: 2>, scalar_prefetch = 0 : i64, scratch_operands = 0 : i64, tpu.core_type = #tpu.core_type<tc>, window_params = [{transform_indices = @transform_0, window_bounds = array<i64: 1, 4, 256>}, {pipeline_mode = #tpu.pipeline_mode<synchronous>, transform_indices = @transform_1, window_bounds = array<i64: 256, 256>}, {pipeline_mode = #tpu.pipeline_mode<synchronous>, transform_indices = @transform_2, window_bounds = array<i64: 256, 256>}, {pipeline_mode = #tpu.pipeline_mode<synchronous>, transform_indices = @transform_3, window_bounds = array<i64: 4, 4>}, {pipeline_mode = #tpu.pipeline_mode<synchronous>, transform_indices = @transform_4, window_bounds = array<i64: 8, 4>}, {transform_indices = @transform_5, window_bounds = array<i64: 1, 8, 256>}]} {
    %c0 = arith.constant 0 : index
    %c0_0 = arith.constant 0 : index
    %c0_1 = arith.constant 0 : index
    %0 = vector.load %arg1[%c0, %c0_0, %c0_1] : memref<1x4x256xf32, #tpu.memory_space<vmem>>, vector<1x4x256xf32>
    %1 = vector.shape_cast %0 : vector<1x4x256xf32> to vector<4x256xf32>
    %2 = arith.truncf %1 : vector<4x256xf32> to vector<4x256xbf16>
    %c0_2 = arith.constant 0 : index
    %c0_3 = arith.constant 0 : index
    %3 = vector.load %arg2[%c0_2, %c0_3] : memref<256x256xbf16, #tpu.memory_space<vmem>>, vector<256x256xbf16>
    %cst = arith.constant dense<0.000000e+00> : vector<4x256xf32>
    %4 = tpu.matmul %2, %3, %cst {dimension_numbers = #tpu.dot_dimension_numbers<[1], [0], [0], [1], [0, 0, 1, 1], [], []>} : vector<4x256xbf16>, vector<256x256xbf16>, vector<4x256xf32> -> vector<4x256xf32>
    %c0_4 = arith.constant 0 : index
    %c0_5 = arith.constant 0 : index
    %5 = vector.load %arg3[%c0_4, %c0_5] : memref<256x256xbf16, #tpu.memory_space<vmem>>, vector<256x256xbf16>
    %cst_6 = arith.constant dense<0.000000e+00> : vector<4x256xf32>
    %6 = tpu.matmul %2, %5, %cst_6 {dimension_numbers = #tpu.dot_dimension_numbers<[1], [0], [0], [1], [0, 0, 1, 1], [], []>} : vector<4x256xbf16>, vector<256x256xbf16>, vector<4x256xf32> -> vector<4x256xf32>
    %7 = arith.mulf %4, %4 : vector<4x256xf32>
    %8 = arith.mulf %6, %6 : vector<4x256xf32>
    %9 = arith.addf %7, %8 : vector<4x256xf32>
    %10 = math.sqrt %9 : vector<4x256xf32>
    %c0_7 = arith.constant 0 : index
    %c0_8 = arith.constant 0 : index
    %11 = vector.load %arg4[%c0_7, %c0_8] : memref<4x4xf32, #tpu.memory_space<vmem>>, vector<4x4xf32>
    %cst_9 = arith.constant dense<0.000000e+00> : vector<4x256xf32>
    %12 = tpu.matmul %11, %10, %cst_9 {dimension_numbers = #tpu.dot_dimension_numbers<[1], [0], [0], [1], [0, 0, 1, 1], [], []>} : vector<4x4xf32>, vector<4x256xf32>, vector<4x256xf32> -> vector<4x256xf32>
    %cst_10 = arith.constant dense<0.000000e+00> : vector<4xf32>
    %13 = vector.multi_reduction <add>, %12, %cst_10 [1] : vector<4x256xf32> to vector<4xf32>
    %14 = vector.shape_cast %13 : vector<4xf32> to vector<4x1xf32>
    %cst_11 = arith.constant 2.560000e+02 : f32
    %15 = vector.broadcast %cst_11 : f32 to vector<4x1xf32>
    %16 = arith.divf %14, %15 : vector<4x1xf32>
    %17 = arith.negf %16 : vector<4x1xf32>
    %18 = math.exp %17 : vector<4x1xf32>
    %cst_12 = arith.constant 1.000000e+00 : f32
    %19 = vector.broadcast %cst_12 : f32 to vector<4x1xf32>
    %20 = arith.addf %19, %18 : vector<4x1xf32>
    %21 = arith.divf %19, %20 : vector<4x1xf32>
    %cst_13 = arith.constant 1.000000e+00 : f32
    %22 = vector.broadcast %cst_13 : f32 to vector<4x1xf32>
    %23 = arith.addf %22, %21 : vector<4x1xf32>
    %24 = vector.broadcast %23 : vector<4x1xf32> to vector<4x256xf32>
    %25 = arith.mulf %1, %24 : vector<4x256xf32>
    %c0_14 = arith.constant 0 : index
    %c0_15 = arith.constant 0 : index
    %26 = vector.load %arg5[%c0_14, %c0_15] : memref<8x4xf32, #tpu.memory_space<vmem>>, vector<8x4xf32>
    %cst_16 = arith.constant dense<0.000000e+00> : vector<8x256xf32>
    %27 = tpu.matmul %26, %25, %cst_16 {dimension_numbers = #tpu.dot_dimension_numbers<[1], [0], [0], [1], [0, 0, 1, 1], [], []>} : vector<8x4xf32>, vector<4x256xf32>, vector<8x256xf32> -> vector<8x256xf32>
    %c0_17 = arith.constant 0 : index
    %c0_18 = arith.constant 0 : index
    %c0_19 = arith.constant 0 : index
    %28 = vector.load %arg6[%c0_17, %c0_18, %c0_19] : memref<1x8x256xf32, #tpu.memory_space<vmem>>, vector<1x8x256xf32>
    %29 = vector.shape_cast %28 : vector<1x8x256xf32> to vector<8x256xf32>
    %30 = vector.shape_cast %27 : vector<8x256xf32> to vector<1x8x256xf32>
    tpu.vector_store %arg6[%c0_17, %c0_18, %c0_19], %30 {strides = array<i32>} : memref<1x8x256xf32, #tpu.memory_space<vmem>>, vector<1x8x256xf32>,
    return
  }
  func.func @transform_0(%arg0: i32) -> (i32, i32, i32) {
    %c0_i32 = arith.constant 0 : i32
    %c0_i32_0 = arith.constant 0 : i32
    %c0_i32_1 = arith.constant 0 : i32
    return %arg0, %c0_i32, %c0_i32_0 : i32, i32, i32
  }
  func.func @transform_1(%arg0: i32) -> (i32, i32) {
    %c0_i32 = arith.constant 0 : i32
    %c0_i32_0 = arith.constant 0 : i32
    %c0_i32_1 = arith.constant 0 : i32
    return %c0_i32, %c0_i32_0 : i32, i32
  }
  func.func @transform_2(%arg0: i32) -> (i32, i32) {
    %c0_i32 = arith.constant 0 : i32
    %c0_i32_0 = arith.constant 0 : i32
    %c0_i32_1 = arith.constant 0 : i32
    return %c0_i32, %c0_i32_0 : i32, i32
  }
  func.func @transform_3(%arg0: i32) -> (i32, i32) {
    %c0_i32 = arith.constant 0 : i32
    %c0_i32_0 = arith.constant 0 : i32
    %c0_i32_1 = arith.constant 0 : i32
    return %c0_i32, %c0_i32_0 : i32, i32
  }
  func.func @transform_4(%arg0: i32) -> (i32, i32) {
    %c0_i32 = arith.constant 0 : i32
    %c0_i32_0 = arith.constant 0 : i32
    %c0_i32_1 = arith.constant 0 : i32
    return %c0_i32, %c0_i32_0 : i32, i32
  }
  func.func @transform_5(%arg0: i32) -> (i32, i32, i32) {
    %c0_i32 = arith.constant 0 : i32
    %c0_i32_0 = arith.constant 0 : i32
    %c0_i32_1 = arith.constant 0 : i32
    return %arg0, %c0_i32, %c0_i32_0 : i32, i32, i32
  }
}

</mosaic_0001>

<llo_original>
// kernel: tpu_custom_call.1
$region0: #{tpu_custom_call.1}
  #allocation0 [shape = 'u32[]', space=smem, size = 0x4, offset = 0x4, fixed_abs, tag = 'smem constant byte address 0x4 - core index']
  #allocation1 [shape = 'u32[144,128]{1,0:T(1,128)}', space=vmem, size = 0x12000, scoped, tag = 'internal scratch']
  %s0 = inlined_call_operand.hbm [shape: f32[2,4,256], index: 0, kind: input, shape index: {}]
  %s1 = inlined_call_operand.hbm [shape: bf16[256,256], index: 1, kind: input, shape index: {}]
  %s2 = inlined_call_operand.hbm [shape: bf16[256,256], index: 2, kind: input, shape index: {}]
  %s3 = inlined_call_operand.vmem [shape: f32[4,4], index: 3, kind: input, shape index: {}]
  %s4 = inlined_call_operand.vmem [shape: f32[8,4], index: 4, kind: input, shape index: {}]
  %s5 = inlined_call_operand.hbm [shape: f32[2,8,256], index: 5, kind: output, shape index: {}]
  %s6 = sld [smem:[#allocation0]]
  $region65: #{tpu_custom_call.1} parent=0
    _
  %s8 = ssub.s32 1, %s6
  %s9 = scalar_select 0, %s8, %s6
  $region1: #{tpu_custom_call.1} parent=0
    #allocation2 [shape = 'u8[8192]{0}', space=vmem, size = 0x2000, scoped, tag = 'input window, operand 0']
    #allocation3 [shape = 's32[2]{0}', space=sflag, size = 0x8, scoped, tag = 'scoped memory for tpu_custom_call.1']
    #allocation4 [shape = 's32[2]{0}', space=sflag, size = 0x8, scoped, tag = 'scoped memory for tpu_custom_call.1']
    #allocation5 [shape = 'u8[131072]{0}', space=vmem, size = 0x20000, scoped, tag = 'input window, operand 1, single buffered']
    #allocation6 [shape = 's32[1]{0}', space=sflag, size = 0x4, scoped, tag = 'scoped memory for tpu_custom_call.1']
    #allocation7 [shape = 'u8[131072]{0}', space=vmem, size = 0x20000, scoped, tag = 'input window, operand 2, single buffered']
    #allocation8 [shape = 'u8[16384]{0}', space=vmem, size = 0x4000, scoped, tag = 'output window, operand 0']
    %10 = vsyncpa [#allocation3], 0
    %s11 = scalar_lea.sflag [#allocation3], 1
    %12 = vsyncpa %s11, 0
    %13 = vsyncpa [#allocation6], 0
    %14 = vsyncpa [#allocation4], 0
    %s15 = scalar_lea.sflag [#allocation4], 1
    %16 = vsyncpa %s15, 0
    loop: start=0, step=1, limit=4
    $region2: #{tpu_custom_call.1} parent=1 // loop_pre_header
      _
    $region3: #{tpu_custom_call.1} parent=1 // loop_header
      %s18 = sphi 0, %s22
      %p19 = scmp.ge.s32.totalorder %s18, 4
      %s28 = sphi 0, %s30
      %s31 = sphi 0, %s28
      %s32 = sphi 0, %s31
      %s48 = sphi 0, %s32
      %s52 = sphi 0, %s52
      %s54 = sphi 0, %s52
      %s55 = sphi 0, %s54
      %s69 = sphi 0, %s55
      %s73 = sphi 0, %s73
      %s75 = sphi 0, %s73
      %s76 = sphi 0, %s75
      %s90 = sphi 0, %s76
      %s94 = sphi 0, %s94
      %s96 = sphi 0, %s94
      %s97 = sphi 0, %s96
      %s111 = sphi 0, %s97
      %s115 = sphi 0, %s115
      %s117 = sphi 0, %s115
      %s118 = sphi 0, %s117
      %s132 = sphi 0, %s118
      %s138 = sphi 0, %s140
      %s141 = sphi 0, %s138
      %s142 = sphi 0, %s141
      %s158 = sphi 0, %s142
    $region4: #{tpu_custom_call.1} parent=1 // loop_header_branch
      %21 = sbr.rel (%p19) target = $region8
    $region5: #{tpu_custom_call.1} parent=1 // loop_body
      %s23 = ssub.s32 %s18, 1
      %s24 = ssub.s32 %s18, 2
      %s25 = sadd.s32 %s18, 1
      %s26 = ssub.s32 %s18, %s25
      %p27 = scmp.eq.s32.totalorder %s26, 0
      %s29 = sadd.s32 %s28, 1
      %s30 = scalar_select %p27, %s28, %s29
      %p33 = pneg %p27
      %p34 = scmp.eq.s32.totalorder %s18, 1
      %p35 = por %p33, %p34
      %p36 = scmp.ne.s32.totalorder %s28, %s31
      %p37 = scmp.eq.s32.totalorder %s18, 0
      %p38 = por %p36, %p37
      %p39 = scmp.ne.s32.totalorder %s28, %s31
      %p40 = scmp.eq.s32.totalorder %s23, 1
      %p41 = por %p39, %p40
      %p42 = scmp.ne.s32.totalorder %s31, %s32
      %p43 = scmp.eq.s32.totalorder %s23, 0
      %p44 = por %p42, %p43
      %p45 = scmp.ne.s32.totalorder %s31, %s32
      %p46 = scmp.eq.s32.totalorder %s24, 1
      %p47 = por %p45, %p46
      %p49 = scmp.ne.s32.totalorder %s32, %s48
      %p50 = scmp.eq.s32.totalorder %s24, 0
      %p51 = por %p49, %p50
      %s53 = sadd.s32 %s52, 1
      %p56 = scmp.eq.s32.totalorder %s18, 1
      %p57 = scmp.ne.s32.totalorder %s52, %s54
      %p58 = scmp.eq.s32.totalorder %s18, 0
      %p59 = por %p57, %p58
      %p60 = scmp.ne.s32.totalorder %s52, %s54
      %p61 = scmp.eq.s32.totalorder %s23, 1
      %p62 = por %p60, %p61
      %p63 = scmp.ne.s32.totalorder %s54, %s55
      %p64 = scmp.eq.s32.totalorder %s23, 0
      %p65 = por %p63, %p64
      %p66 = scmp.ne.s32.totalorder %s54, %s55
      %p67 = scmp.eq.s32.totalorder %s24, 1
      %p68 = por %p66, %p67
      %p70 = scmp.ne.s32.totalorder %s55, %s69
      %p71 = scmp.eq.s32.totalorder %s24, 0
      %p72 = por %p70, %p71
      %s74 = sadd.s32 %s73, 1
      %p77 = scmp.eq.s32.totalorder %s18, 1
      %p78 = scmp.ne.s32.totalorder %s73, %s75
      %p79 = scmp.eq.s32.totalorder %s18, 0
      %p80 = por %p78, %p79
      %p81 = scmp.ne.s32.totalorder %s73, %s75
      %p82 = scmp.eq.s32.totalorder %s23, 1
      %p83 = por %p81, %p82
      %p84 = scmp.ne.s32.totalorder %s75, %s76
      %p85 = scmp.eq.s32.totalorder %s23, 0
      %p86 = por %p84, %p85
      %p87 = scmp.ne.s32.totalorder %s75, %s76
      %p88 = scmp.eq.s32.totalorder %s24, 1
      %p89 = por %p87, %p88
      %p91 = scmp.ne.s32.totalorder %s76, %s90
      %p92 = scmp.eq.s32.totalorder %s24, 0
      %p93 = por %p91, %p92
      %s95 = sadd.s32 %s94, 1
      %p98 = scmp.eq.s32.totalorder %s18, 1
      %p99 = scmp.ne.s32.totalorder %s94, %s96
      %p100 = scmp.eq.s32.totalorder %s18, 0
      %p101 = por %p99, %p100
      %p102 = scmp.ne.s32.totalorder %s94, %s96
      %p103 = scmp.eq.s32.totalorder %s23, 1
      %p104 = por %p102, %p103
      %p105 = scmp.ne.s32.totalorder %s96, %s97
      %p106 = scmp.eq.s32.totalorder %s23, 0
      %p107 = por %p105, %p106
      %p108 = scmp.ne.s32.totalorder %s96, %s97
      %p109 = scmp.eq.s32.totalorder %s24, 1
      %p110 = por %p108, %p109
      %p112 = scmp.ne.s32.totalorder %s97, %s111
      %p113 = scmp.eq.s32.totalorder %s24, 0
      %p114 = por %p112, %p113
      %s116 = sadd.s32 %s115, 1
      %p119 = scmp.eq.s32.totalorder %s18, 1
      %p120 = scmp.ne.s32.totalorder %s115, %s117
      %p121 = scmp.eq.s32.totalorder %s18, 0
      %p122 = por %p120, %p121
      %p123 = scmp.ne.s32.totalorder %s115, %s117
      %p124 = scmp.eq.s32.totalorder %s23, 1
      %p125 = por %p123, %p124
      %p126 = scmp.ne.s32.totalorder %s117, %s118
      %p127 = scmp.eq.s32.totalorder %s23, 0
      %p128 = por %p126, %p127
      %p129 = scmp.ne.s32.totalorder %s117, %s118
      %p130 = scmp.eq.s32.totalorder %s24, 1
      %p131 = por %p129, %p130
      %p133 = scmp.ne.s32.totalorder %s118, %s132
      %p134 = scmp.eq.s32.totalorder %s24, 0
      %p135 = por %p133, %p134
      %s136 = ssub.s32 %s18, %s25
      %p137 = scmp.eq.s32.totalorder %s136, 0
      %s139 = sadd.s32 %s138, 1
      %s140 = scalar_select %p137, %s138, %s139
      %p143 = pneg %p137
      %p144 = scmp.eq.s32.totalorder %s18, 1
      %p145 = por %p143, %p144
      %p146 = scmp.ne.s32.totalorder %s138, %s141
      %p147 = scmp.eq.s32.totalorder %s18, 0
      %p148 = por %p146, %p147
      %p149 = scmp.ne.s32.totalorder %s138, %s141
      %p150 = scmp.eq.s32.totalorder %s23, 1
      %p151 = por %p149, %p150
      %p152 = scmp.ne.s32.totalorder %s141, %s142
      %p153 = scmp.eq.s32.totalorder %s23, 0
      %p154 = por %p152, %p153
      %p155 = scmp.ne.s32.totalorder %s141, %s142
      %p156 = scmp.eq.s32.totalorder %s24, 1
      %p157 = por %p155, %p156
      %p159 = scmp.ne.s32.totalorder %s142, %s158
      %p160 = scmp.eq.s32.totalorder %s24, 0
      %p161 = por %p159, %p160
      %p162 = scmp.le.s32.totalorder 1, %s18
      %p163 = scmp.lt.s32.totalorder %s18, 3
      %p164 = pnand %p162, %p163
      %p165 = pneg %p164
      // Predicated region
      $region9: #{tpu_custom_call.1} parent=5 // pred_check
        _
      $region10: #{tpu_custom_call.1} parent=5 // pred_check_branch
        %167 = sbr.rel (%p164) target = $region12
      $region11: #{tpu_custom_call.1} parent=5 // pred_region
        %s168 = ssub.s32 %s18, 1
        // Predicated region
        $region13: #{tpu_custom_call.1} parent=11 // pred_check
          %p169 = pneg %p65
        $region14: #{tpu_custom_call.1} parent=11 // pred_check_branch
          %171 = sbr.rel (%p169) target = $region16
        $region15: #{tpu_custom_call.1} parent=11 // pred_region
          %s173 = ssub.s32 4096, 4096
          %174 = vsyncadd [#allocation6], %s173
          %s175 = sshll.u32 [#allocation5], 4
          %s176 = int_to_ptr.vmem [resolvable:$true] %s175
          %181 = dma.hbm_to_vmem [thread:$0]  %s1, 4096, %s176, [#allocation6], 128, 128, 8
        $region16: #{tpu_custom_call.1} parent=11 // pred_fallthru
          _
        // Predicated region
        $region17: #{tpu_custom_call.1} parent=11 // pred_check
          %p182 = pneg %p86
        $region18: #{tpu_custom_call.1} parent=11 // pred_check_branch
          %184 = sbr.rel (%p182) target = $region20
        $region19: #{tpu_custom_call.1} parent=11 // pred_region
          %s186 = ssub.s32 4096, 4096
          %187 = vsyncadd [#allocation6], %s186
          %s188 = sshll.u32 [#allocation7], 4
          %s189 = int_to_ptr.vmem [resolvable:$true] %s188
          %194 = dma.hbm_to_vmem [thread:$0]  %s2, 4096, %s189, [#allocation6], 128, 128, 8
        $region20: #{tpu_custom_call.1} parent=11 // pred_fallthru
          _
        // Predicated region
        $region21: #{tpu_custom_call.1} parent=11 // pred_check
          %p195 = pneg %p107
        $region22: #{tpu_custom_call.1} parent=11 // pred_check_branch
          %197 = sbr.rel (%p195) target = $region24
        $region23: #{tpu_custom_call.1} parent=11 // pred_region
          _
        $region24: #{tpu_custom_call.1} parent=11 // pred_fallthru
          _
        // Predicated region
        $region25: #{tpu_custom_call.1} parent=11 // pred_check
          %p198 = pneg %p128
        $region26: #{tpu_custom_call.1} parent=11 // pred_check_branch
          %200 = sbr.rel (%p198) target = $region28
        $region27: #{tpu_custom_call.1} parent=11 // pred_region
          _
        $region28: #{tpu_custom_call.1} parent=11 // pred_fallthru
          _
      $region12: #{tpu_custom_call.1} parent=5 // pred_fallthru
        _
      %p201 = scmp.lt.s32.totalorder %s18, 2
      // Predicated region
      $region29: #{tpu_custom_call.1} parent=5 // pred_check
        %p202 = pneg %p201
      $region30: #{tpu_custom_call.1} parent=5 // pred_check_branch
        %204 = sbr.rel (%p202) target = $region32
      $region31: #{tpu_custom_call.1} parent=5 // pred_region
        // Predicated region
        $region33: #{tpu_custom_call.1} parent=31 // pred_check
          %p205 = pneg %p38
        $region34: #{tpu_custom_call.1} parent=31 // pred_check_branch
          %207 = sbr.rel (%p205) target = $region36
        $region35: #{tpu_custom_call.1} parent=31 // pred_region
          %s208 = sand.u32 %s28, 1
          %s209 = scalar_lea.sflag [#allocation3], %s208
          %s210 = sand.u32 %s28, 1
          %s211 = smul.addr %s210, 8
          %s212 = scalar_lea.vmem [#allocation2], %s211
          %s214 = ssub.s32 128, 128
          %215 = vsyncadd %s209, %s214
          %s216 = smul.addr %s18, 2
          %s217 = smul.addr %s216, 64
          %s218 = scalar_lea.hbm %s0, %s217
          %s220 = sshll.u32 %s212, 4
          %s221 = int_to_ptr.vmem [resolvable:$true] %s220
          %223 = dma.hbm_to_vmem [thread:$0]  %s218, 128, %s221, %s209
        $region36: #{tpu_custom_call.1} parent=31 // pred_fallthru
          _
      $region32: #{tpu_custom_call.1} parent=5 // pred_fallthru
        _
      %p224 = scmp.le.s32.totalorder 1, %s18
      %p225 = scmp.lt.s32.totalorder %s18, 3
      %p226 = pnand %p224, %p225
      %p227 = pneg %p226
      // Predicated region
      $region37: #{tpu_custom_call.1} parent=5 // pred_check
        _
      $region38: #{tpu_custom_call.1} parent=5 // pred_check_branch
        %229 = sbr.rel (%p226) target = $region40
      $region39: #{tpu_custom_call.1} parent=5 // pred_region
        %s230 = ssub.s32 %s18, 1
        %s231 = sand.u32 %s31, 1
        %s232 = scalar_lea.sflag [#allocation3], %s231
        %s233 = sand.u32 %s31, 1
        %s234 = smul.addr %s233, 8
        %s235 = scalar_lea.vmem [#allocation2], %s234
        // Predicated region
        $region41: #{tpu_custom_call.1} parent=39 // pred_check
          %p236 = pneg %p44
        $region42: #{tpu_custom_call.1} parent=39 // pred_check_branch
          %238 = sbr.rel (%p236) target = $region44
        $region43: #{tpu_custom_call.1} parent=39 // pred_region
          %239 = dma.done %s232, 128
        $region44: #{tpu_custom_call.1} parent=39 // pred_fallthru
          _
        // Predicated region
        $region45: #{tpu_custom_call.1} parent=39 // pred_check
          %p240 = pneg %p65
        $region46: #{tpu_custom_call.1} parent=39 // pred_check_branch
          %242 = sbr.rel (%p240) target = $region48
        $region47: #{tpu_custom_call.1} parent=39 // pred_region
          %243 = dma.done [#allocation6], 4096
        $region48: #{tpu_custom_call.1} parent=39 // pred_fallthru
          _
        // Predicated region
        $region49: #{tpu_custom_call.1} parent=39 // pred_check
          %p244 = pneg %p86
        $region50: #{tpu_custom_call.1} parent=39 // pred_check_branch
          %246 = sbr.rel (%p244) target = $region52
        $region51: #{tpu_custom_call.1} parent=39 // pred_region
          %247 = dma.done [#allocation6], 4096
        $region52: #{tpu_custom_call.1} parent=39 // pred_fallthru
          _
        %s248 = sand.u32 %s31, 1
        %s249 = scalar_lea.sflag [#allocation3], %s248
        %s250 = sand.u32 %s31, 1
        %s251 = smul.addr %s250, 8
        %s252 = scalar_lea.vmem [#allocation2], %s251
        %p253 = pneg %p44
        %p254 = pneg %p41
        %p255 = pneg %p65
        %p256 = pneg %p62
        %p257 = pneg %p86
        %p258 = pneg %p83
        %p259 = pneg %p107
        %p260 = pneg %p104
        %p261 = pneg %p128
        %p262 = pneg %p125
        %p263 = pneg %p154
        %p264 = pneg %p151
        %s265 = sand.u32 %s141, 1
        %s266 = scalar_lea.sflag [#allocation4], %s265
        %s267 = sand.u32 %s141, 1
        %s268 = smul.addr %s267, 16
        %s269 = scalar_lea.vmem [#allocation8], %s268
        %v270 = vld [vmem:[%s235] sm:$0xff]
        %v272 = vcombine.high %v270, %v270
        %v274 = vpack.c.bf16 %v270, %v270
        %v275 = vpack.c.bf16 %v272, %v272
        %v276 = vld [vmem:[#allocation5] sm:$0xff]
        %v277 = vld [vmem:[#allocation5 + $0x8] sm:$0xff]
        %v278 = vld [vmem:[#allocation5 + $0x10] sm:$0xff]
        %v279 = vld [vmem:[#allocation5 + $0x18] sm:$0xff]
        %v280 = vld [vmem:[#allocation5 + $0x20] sm:$0xff]
        %v281 = vld [vmem:[#allocation5 + $0x28] sm:$0xff]
        %v282 = vld [vmem:[#allocation5 + $0x30] sm:$0xff]
        %v283 = vld [vmem:[#allocation5 + $0x38] sm:$0xff]
        %v284 = vld [vmem:[#allocation5 + $0x40] sm:$0xff]
        %v285 = vld [vmem:[#allocation5 + $0x48] sm:$0xff]
        %v286 = vld [vmem:[#allocation5 + $0x50] sm:$0xff]
        %v287 = vld [vmem:[#allocation5 + $0x58] sm:$0xff]
        %v288 = vld [vmem:[#allocation5 + $0x60] sm:$0xff]
        %v289 = vld [vmem:[#allocation5 + $0x68] sm:$0xff]
        %v290 = vld [vmem:[#allocation5 + $0x70] sm:$0xff]
        %v291 = vld [vmem:[#allocation5 + $0x78] sm:$0xff]
        %v292 = vld [vmem:[#allocation5 + $0x80] sm:$0xff]
        %v293 = vld [vmem:[#allocation5 + $0x88] sm:$0xff]
        %v294 = vld [vmem:[#allocation5 + $0x90] sm:$0xff]
        %v295 = vld [vmem:[#allocation5 + $0x98] sm:$0xff]
        %v296 = vld [vmem:[#allocation5 + $0xa0] sm:$0xff]
        %v297 = vld [vmem:[#allocation5 + $0xa8] sm:$0xff]
        %v298 = vld [vmem:[#allocation5 + $0xb0] sm:$0xff]
        %v299 = vld [vmem:[#allocation5 + $0xb8] sm:$0xff]
        %v300 = vld [vmem:[#allocation5 + $0xc0] sm:$0xff]
        %v301 = vld [vmem:[#allocation5 + $0xc8] sm:$0xff]
        %v302 = vld [vmem:[#allocation5 + $0xd0] sm:$0xff]
        %v303 = vld [vmem:[#allocation5 + $0xd8] sm:$0xff]
        %v304 = vld [vmem:[#allocation5 + $0xe0] sm:$0xff]
        %v305 = vld [vmem:[#allocation5 + $0xe8] sm:$0xff]
        %v306 = vld [vmem:[#allocation5 + $0xf0] sm:$0xff]
        %v307 = vld [vmem:[#allocation5 + $0xf8] sm:$0xff]
        %v340 = vunpack.c.l.b16 %v276
        %v341 = vunpack.c.h.b16 %v276
        %v342 = vunpack.c.l.b16 %v277
        %v343 = vunpack.c.h.b16 %v277
        %v344 = vunpack.c.l.b16 %v278
        %v345 = vunpack.c.h.b16 %v278
        %v346 = vunpack.c.l.b16 %v279
        %v347 = vunpack.c.h.b16 %v279
        %v348 = vunpack.c.l.b16 %v280
        %v349 = vunpack.c.h.b16 %v280
        %v350 = vunpack.c.l.b16 %v281
        %v351 = vunpack.c.h.b16 %v281
        %v352 = vunpack.c.l.b16 %v282
        %v353 = vunpack.c.h.b16 %v282
        %v354 = vunpack.c.l.b16 %v283
        %v355 = vunpack.c.h.b16 %v283
        %v356 = vunpack.c.l.b16 %v284
        %v357 = vunpack.c.h.b16 %v284
        %v358 = vunpack.c.l.b16 %v285
        %v359 = vunpack.c.h.b16 %v285
        %v360 = vunpack.c.l.b16 %v286
        %v361 = vunpack.c.h.b16 %v286
        %v362 = vunpack.c.l.b16 %v287
        %v363 = vunpack.c.h.b16 %v287
        %v364 = vunpack.c.l.b16 %v288
        %v365 = vunpack.c.h.b16 %v288
        %v366 = vunpack.c.l.b16 %v289
        %v367 = vunpack.c.h.b16 %v289
        %v368 = vunpack.c.l.b16 %v290
        %v369 = vunpack.c.h.b16 %v290
        %v370 = vunpack.c.l.b16 %v291
        %v371 = vunpack.c.h.b16 %v291
        %v372 = vunpack.c.l.b16 %v292
        %v373 = vunpack.c.h.b16 %v292
        %v374 = vunpack.c.l.b16 %v293
        %v375 = vunpack.c.h.b16 %v293
        %v376 = vunpack.c.l.b16 %v294
        %v377 = vunpack.c.h.b16 %v294
        %v378 = vunpack.c.l.b16 %v295
        %v379 = vunpack.c.h.b16 %v295
        %v380 = vunpack.c.l.b16 %v296
        %v381 = vunpack.c.h.b16 %v296
        %v382 = vunpack.c.l.b16 %v297
        %v383 = vunpack.c.h.b16 %v297
        %v384 = vunpack.c.l.b16 %v298
        %v385 = vunpack.c.h.b16 %v298
        %v386 = vunpack.c.l.b16 %v299
        %v387 = vunpack.c.h.b16 %v299
        %v388 = vunpack.c.l.b16 %v300
        %v389 = vunpack.c.h.b16 %v300
        %v390 = vunpack.c.l.b16 %v301
        %v391 = vunpack.c.h.b16 %v301
        %v392 = vunpack.c.l.b16 %v302
        %v393 = vunpack.c.h.b16 %v302
        %v394 = vunpack.c.l.b16 %v303
        %v395 = vunpack.c.h.b16 %v303
        %v396 = vunpack.c.l.b16 %v304
        %v397 = vunpack.c.h.b16 %v304
        %v398 = vunpack.c.l.b16 %v305
        %v399 = vunpack.c.h.b16 %v305
        %v400 = vunpack.c.l.b16 %v306
        %v401 = vunpack.c.h.b16 %v306
        %v402 = vunpack.c.l.b16 %v307
        %v403 = vunpack.c.h.b16 %v307
        %v404 = vpack.c.b16 %v342, %v340
        %v405 = vpack.c.b16 %v343, %v341
        %v406 = vpack.c.b16 %v346, %v344
        %v407 = vpack.c.b16 %v347, %v345
        %v408 = vpack.c.b16 %v350, %v348
        %v409 = vpack.c.b16 %v351, %v349
        %v410 = vpack.c.b16 %v354, %v352
        %v411 = vpack.c.b16 %v355, %v353
        %v412 = vpack.c.b16 %v358, %v356
        %v413 = vpack.c.b16 %v359, %v357
        %v414 = vpack.c.b16 %v362, %v360
        %v415 = vpack.c.b16 %v363, %v361
        %v416 = vpack.c.b16 %v366, %v364
        %v417 = vpack.c.b16 %v367, %v365
        %v418 = vpack.c.b16 %v370, %v368
        %v419 = vpack.c.b16 %v371, %v369
        %v420 = vpack.c.b16 %v374, %v372
        %v421 = vpack.c.b16 %v375, %v373
        %v422 = vpack.c.b16 %v378, %v376
        %v423 = vpack.c.b16 %v379, %v377
        %v424 = vpack.c.b16 %v382, %v380
        %v425 = vpack.c.b16 %v383, %v381
        %v426 = vpack.c.b16 %v386, %v384
        %v427 = vpack.c.b16 %v387, %v385
        %v428 = vpack.c.b16 %v390, %v388
        %v429 = vpack.c.b16 %v391, %v389
        %v430 = vpack.c.b16 %v394, %v392
        %v431 = vpack.c.b16 %v395, %v393
        %v432 = vpack.c.b16 %v398, %v396
        %v433 = vpack.c.b16 %v399, %v397
        %v434 = vpack.c.b16 %v402, %v400
        %v435 = vpack.c.b16 %v403, %v401
        %468 = vmatprep.subr.bf16.mxu0 %v405
        %469 = vmatpush1.bf16.msra.mxu0 %v404
        %470 = vmatprep.subr.bf16.mxu0 %v407
        %471 = vmatpush1.bf16.msra.mxu0 %v406
        %472 = vmatprep.subr.bf16.mxu0 %v409
        %473 = vmatpush1.bf16.msra.mxu0 %v408
        %474 = vmatprep.subr.bf16.mxu0 %v411
        %475 = vmatpush1.bf16.msra.mxu0 %v410
        %476 = vmatprep.subr.bf16.mxu0 %v413
        %477 = vmatpush1.bf16.msra.mxu0 %v412
        %478 = vmatprep.subr.bf16.mxu0 %v415
        %479 = vmatpush1.bf16.msra.mxu0 %v414
        %480 = vmatprep.subr.bf16.mxu0 %v417
        %481 = vmatpush1.bf16.msra.mxu0 %v416
        %482 = vmatprep.subr.bf16.mxu0 %v419
        %483 = vmatpush1.bf16.msra.mxu0 %v418
        %484 = vmatprep.subr.bf16.mxu0 %v421
        %485 = vmatpush1.bf16.msra.mxu0 %v420
        %486 = vmatprep.subr.bf16.mxu0 %v423
        %487 = vmatpush1.bf16.msra.mxu0 %v422
        %488 = vmatprep.subr.bf16.mxu0 %v425
        %489 = vmatpush1.bf16.msra.mxu0 %v424
        %490 = vmatprep.subr.bf16.mxu0 %v427
        %491 = vmatpush1.bf16.msra.mxu0 %v426
        %492 = vmatprep.subr.bf16.mxu0 %v429
        %493 = vmatpush1.bf16.msra.mxu0 %v428
        %494 = vmatprep.subr.bf16.mxu0 %v431
        %495 = vmatpush1.bf16.msra.mxu0 %v430
        %496 = vmatprep.subr.bf16.mxu0 %v433
        %497 = vmatpush1.bf16.msra.mxu0 %v432
        %498 = vmatprep.subr.bf16.mxu0 %v435
        %499 = vmatpush1.bf16.msra.mxu0 %v434
        %500 = vmatprep.mubr.bf16.mxu0 %v275
        %501 = vmatmul.mubr.bf16.gmra.mrb[0].mxu0 %v274
        %v502 = vpop.f32.mrb[0].mxu0
        %v503 = vadd.f32 0.0, %v502
        %v504 = vpop.f32.mrb[0].mxu0
        %v505 = vadd.f32 0.0, %v504
        %v506 = vpop.f32.mrb[0].mxu0
        %v507 = vpop.f32.mrb[0].mxu0
        %508 = vdwg.mxu0
        %v509 = vld [vmem:[#allocation7] sm:$0xff]
        %v510 = vld [vmem:[#allocation7 + $0x8] sm:$0xff]
        %v511 = vld [vmem:[#allocation7 + $0x10] sm:$0xff]
        %v512 = vld [vmem:[#allocation7 + $0x18] sm:$0xff]
        %v513 = vld [vmem:[#allocation7 + $0x20] sm:$0xff]
        %v514 = vld [vmem:[#allocation7 + $0x28] sm:$0xff]
        %v515 = vld [vmem:[#allocation7 + $0x30] sm:$0xff]
        %v516 = vld [vmem:[#allocation7 + $0x38] sm:$0xff]
        %v517 = vld [vmem:[#allocation7 + $0x40] sm:$0xff]
        %v518 = vld [vmem:[#allocation7 + $0x48] sm:$0xff]
        %v519 = vld [vmem:[#allocation7 + $0x50] sm:$0xff]
        %v520 = vld [vmem:[#allocation7 + $0x58] sm:$0xff]
        %v521 = vld [vmem:[#allocation7 + $0x60] sm:$0xff]
        %v522 = vld [vmem:[#allocation7 + $0x68] sm:$0xff]
        %v523 = vld [vmem:[#allocation7 + $0x70] sm:$0xff]
        %v524 = vld [vmem:[#allocation7 + $0x78] sm:$0xff]
        %v525 = vld [vmem:[#allocation7 + $0x80] sm:$0xff]
        %v526 = vld [vmem:[#allocation7 + $0x88] sm:$0xff]
        %v527 = vld [vmem:[#allocation7 + $0x90] sm:$0xff]
        %v528 = vld [vmem:[#allocation7 + $0x98] sm:$0xff]
        %v529 = vld [vmem:[#allocation7 + $0xa0] sm:$0xff]
        %v530 = vld [vmem:[#allocation7 + $0xa8] sm:$0xff]
        %v531 = vld [vmem:[#allocation7 + $0xb0] sm:$0xff]
        %v532 = vld [vmem:[#allocation7 + $0xb8] sm:$0xff]
        %v533 = vld [vmem:[#allocation7 + $0xc0] sm:$0xff]
        %v534 = vld [vmem:[#allocation7 + $0xc8] sm:$0xff]
        %v535 = vld [vmem:[#allocation7 + $0xd0] sm:$0xff]
        %v536 = vld [vmem:[#allocation7 + $0xd8] sm:$0xff]
        %v537 = vld [vmem:[#allocation7 + $0xe0] sm:$0xff]
        %v538 = vld [vmem:[#allocation7 + $0xe8] sm:$0xff]
        %v539 = vld [vmem:[#allocation7 + $0xf0] sm:$0xff]
        %v540 = vld [vmem:[#allocation7 + $0xf8] sm:$0xff]
        %v573 = vunpack.c.l.b16 %v509
        %v574 = vunpack.c.h.b16 %v509
        %v575 = vunpack.c.l.b16 %v510
        %v576 = vunpack.c.h.b16 %v510
        %v577 = vunpack.c.l.b16 %v511
        %v578 = vunpack.c.h.b16 %v511
        %v579 = vunpack.c.l.b16 %v512
        %v580 = vunpack.c.h.b16 %v512
        %v581 = vunpack.c.l.b16 %v513
        %v582 = vunpack.c.h.b16 %v513
        %v583 = vunpack.c.l.b16 %v514
        %v584 = vunpack.c.h.b16 %v514
        %v585 = vunpack.c.l.b16 %v515
        %v586 = vunpack.c.h.b16 %v515
        %v587 = vunpack.c.l.b16 %v516
        %v588 = vunpack.c.h.b16 %v516
        %v589 = vunpack.c.l.b16 %v517
        %v590 = vunpack.c.h.b16 %v517
        %v591 = vunpack.c.l.b16 %v518
        %v592 = vunpack.c.h.b16 %v518
        %v593 = vunpack.c.l.b16 %v519
        %v594 = vunpack.c.h.b16 %v519
        %v595 = vunpack.c.l.b16 %v520
        %v596 = vunpack.c.h.b16 %v520
        %v597 = vunpack.c.l.b16 %v521
        %v598 = vunpack.c.h.b16 %v521
        %v599 = vunpack.c.l.b16 %v522
        %v600 = vunpack.c.h.b16 %v522
        %v601 = vunpack.c.l.b16 %v523
        %v602 = vunpack.c.h.b16 %v523
        %v603 = vunpack.c.l.b16 %v524
        %v604 = vunpack.c.h.b16 %v524
        %v605 = vunpack.c.l.b16 %v525
        %v606 = vunpack.c.h.b16 %v525
        %v607 = vunpack.c.l.b16 %v526
        %v608 = vunpack.c.h.b16 %v526
        %v609 = vunpack.c.l.b16 %v527
        %v610 = vunpack.c.h.b16 %v527
        %v611 = vunpack.c.l.b16 %v528
        %v612 = vunpack.c.h.b16 %v528
        %v613 = vunpack.c.l.b16 %v529
        %v614 = vunpack.c.h.b16 %v529
        %v615 = vunpack.c.l.b16 %v530
        %v616 = vunpack.c.h.b16 %v530
        %v617 = vunpack.c.l.b16 %v531
        %v618 = vunpack.c.h.b16 %v531
        %v619 = vunpack.c.l.b16 %v532
        %v620 = vunpack.c.h.b16 %v532
        %v621 = vunpack.c.l.b16 %v533
        %v622 = vunpack.c.h.b16 %v533
        %v623 = vunpack.c.l.b16 %v534
        %v624 = vunpack.c.h.b16 %v534
        %v625 = vunpack.c.l.b16 %v535
        %v626 = vunpack.c.h.b16 %v535
        %v627 = vunpack.c.l.b16 %v536
        %v628 = vunpack.c.h.b16 %v536
        %v629 = vunpack.c.l.b16 %v537
        %v630 = vunpack.c.h.b16 %v537
        %v631 = vunpack.c.l.b16 %v538
        %v632 = vunpack.c.h.b16 %v538
        %v633 = vunpack.c.l.b16 %v539
        %v634 = vunpack.c.h.b16 %v539
        %v635 = vunpack.c.l.b16 %v540
        %v636 = vunpack.c.h.b16 %v540
        %v637 = vpack.c.b16 %v575, %v573
        %v638 = vpack.c.b16 %v576, %v574
        %v639 = vpack.c.b16 %v579, %v577
        %v640 = vpack.c.b16 %v580, %v578
        %v641 = vpack.c.b16 %v583, %v581
        %v642 = vpack.c.b16 %v584, %v582
        %v643 = vpack.c.b16 %v587, %v585
        %v644 = vpack.c.b16 %v588, %v586
        %v645 = vpack.c.b16 %v591, %v589
        %v646 = vpack.c.b16 %v592, %v590
        %v647 = vpack.c.b16 %v595, %v593
        %v648 = vpack.c.b16 %v596, %v594
        %v649 = vpack.c.b16 %v599, %v597
        %v650 = vpack.c.b16 %v600, %v598
        %v651 = vpack.c.b16 %v603, %v601
        %v652 = vpack.c.b16 %v604, %v602
        %v653 = vpack.c.b16 %v607, %v605
        %v654 = vpack.c.b16 %v608, %v606
        %v655 = vpack.c.b16 %v611, %v609
        %v656 = vpack.c.b16 %v612, %v610
        %v657 = vpack.c.b16 %v615, %v613
        %v658 = vpack.c.b16 %v616, %v614
        %v659 = vpack.c.b16 %v619, %v617
        %v660 = vpack.c.b16 %v620, %v618
        %v661 = vpack.c.b16 %v623, %v621
        %v662 = vpack.c.b16 %v624, %v622
        %v663 = vpack.c.b16 %v627, %v625
        %v664 = vpack.c.b16 %v628, %v626
        %v665 = vpack.c.b16 %v631, %v629
        %v666 = vpack.c.b16 %v632, %v630
        %v667 = vpack.c.b16 %v635, %v633
        %v668 = vpack.c.b16 %v636, %v634
        %701 = vmatprep.subr.bf16.mxu0 %v638
        %702 = vmatpush1.bf16.msra.mxu0 %v637
        %703 = vmatprep.subr.bf16.mxu0 %v640
        %704 = vmatpush1.bf16.msra.mxu0 %v639
        %705 = vmatprep.subr.bf16.mxu0 %v642
        %706 = vmatpush1.bf16.msra.mxu0 %v641
        %707 = vmatprep.subr.bf16.mxu0 %v644
        %708 = vmatpush1.bf16.msra.mxu0 %v643
        %709 = vmatprep.subr.bf16.mxu0 %v646
        %710 = vmatpush1.bf16.msra.mxu0 %v645
        %711 = vmatprep.subr.bf16.mxu0 %v648
        %712 = vmatpush1.bf16.msra.mxu0 %v647
        %713 = vmatprep.subr.bf16.mxu0 %v650
        %714 = vmatpush1.bf16.msra.mxu0 %v649
        %715 = vmatprep.subr.bf16.mxu0 %v652
        %716 = vmatpush1.bf16.msra.mxu0 %v651
        %717 = vmatprep.subr.bf16.mxu0 %v654
        %718 = vmatpush1.bf16.msra.mxu0 %v653
        %719 = vmatprep.subr.bf16.mxu0 %v656
        %720 = vmatpush1.bf16.msra.mxu0 %v655
        %721 = vmatprep.subr.bf16.mxu0 %v658
        %722 = vmatpush1.bf16.msra.mxu0 %v657
        %723 = vmatprep.subr.bf16.mxu0 %v660
        %724 = vmatpush1.bf16.msra.mxu0 %v659
        %725 = vmatprep.subr.bf16.mxu0 %v662
        %726 = vmatpush1.bf16.msra.mxu0 %v661
        %727 = vmatprep.subr.bf16.mxu0 %v664
        %728 = vmatpush1.bf16.msra.mxu0 %v663
        %729 = vmatprep.subr.bf16.mxu0 %v666
        %730 = vmatpush1.bf16.msra.mxu0 %v665
        %731 = vmatprep.subr.bf16.mxu0 %v668
        %732 = vmatpush1.bf16.msra.mxu0 %v667
        %733 = vmatprep.mubr.bf16.mxu0 %v275
        %734 = vmatmul.mubr.bf16.gmra.mrb[0].mxu0 %v274
        %v735 = vpop.f32.mrb[0].mxu0
        %v736 = vadd.f32 0.0, %v735
        %v737 = vpop.f32.mrb[0].mxu0
        %v738 = vadd.f32 0.0, %v737
        %v739 = vpop.f32.mrb[0].mxu0
        %v740 = vpop.f32.mrb[0].mxu0
        %741 = vdwg.mxu0
        %v742 = vmul.f32 %v503, %v503
        %v743 = vmul.f32 %v505, %v505
        %v744 = vmul.f32 %v736, %v736
        %v745 = vmul.f32 %v738, %v738
        %v746 = vadd.f32 %v742, %v744
        %v747 = vadd.f32 %v743, %v745
        %v748 = vrsqrt.pop %v746
        %v749 = vmul.f32 %v746, %v748
        %vm750 = vcmp.eq.f32.partialorder %v746, inf
        %v751 = vsel %vm750, %v746, %v749
        %vm752 = vcmp.eq.f32.partialorder %v746, 0.0
        %v753 = vand.u32 %v746, 2147483648
        %v754 = vsel %vm752, %v753, %v751
        %v755 = vrsqrt.pop %v747
        %v756 = vmul.f32 %v747, %v755
        %vm757 = vcmp.eq.f32.partialorder %v747, inf
        %v758 = vsel %vm757, %v747, %v756
        %vm759 = vcmp.eq.f32.partialorder %v747, 0.0
        %v760 = vand.u32 %v747, 2147483648
        %v761 = vsel %vm759, %v760, %v758
        %v762 = vld [vmem:[%s3] sm:$0xf]
        %vm763 = vcmask 31744
        %v765 = vsel %vm763, %v762, 0
        %vm767 = vcmask 1043456
        %v769 = vsel %vm767, %v754, 0
        %v772 = vsel %vm767, %v761, 0
        %774 = vmatprep.subr.mxu0 %v772
        %775 = vmatpush1.msra.mxu0 %v769
        %776 = vmatprep.subr.mxu0 0.0
        %777 = vmatpush1.msra.mxu0 0.0
        %778 = vmatprep.subr.mxu0 0.0
        %779 = vmatpush1.msra.mxu0 0.0
        %780 = vmatprep.subr.mxu0 0.0
        %781 = vmatpush1.msra.mxu0 0.0
        %782 = vmatprep.subr.mxu0 0.0
        %783 = vmatpush1.msra.mxu0 0.0
        %784 = vmatprep.subr.mxu0 0.0
        %785 = vmatpush1.msra.mxu0 0.0
        %786 = vmatprep.subr.mxu0 0.0
        %787 = vmatpush1.msra.mxu0 0.0
        %788 = vmatprep.subr.mxu0 0.0
        %789 = vmatpush1.msra.mxu0 0.0
        %790 = vmatprep.subr.mxu0 0.0
        %791 = vmatpush1.msra.mxu0 0.0
        %792 = vmatprep.subr.mxu0 0.0
        %793 = vmatpush1.msra.mxu0 0.0
        %794 = vmatprep.subr.mxu0 0.0
        %795 = vmatpush1.msra.mxu0 0.0
        %796 = vmatprep.subr.mxu0 0.0
        %797 = vmatpush1.msra.mxu0 0.0
        %798 = vmatprep.subr.mxu0 0.0
        %799 = vmatpush1.msra.mxu0 0.0
        %800 = vmatprep.subr.mxu0 0.0
        %801 = vmatpush1.msra.mxu0 0.0
        %802 = vmatprep.subr.mxu0 0.0
        %803 = vmatpush1.msra.mxu0 0.0
        %804 = vmatprep.subr.mxu0 0.0
        %805 = vmatpush1.msra.mxu0 0.0
        %806 = vmatprep.subr.mxu0 0.0
        %807 = vmatpush1.msra.mxu0 0.0
        %808 = vmatprep.subr.mxu0 0.0
        %809 = vmatpush1.msra.mxu0 0.0
        %810 = vmatprep.subr.mxu0 0.0
        %811 = vmatpush1.msra.mxu0 0.0
        %812 = vmatprep.subr.mxu0 0.0
        %813 = vmatpush1.msra.mxu0 0.0
        %814 = vmatprep.subr.mxu0 0.0
        %815 = vmatpush1.msra.mxu0 0.0
        %816 = vmatprep.subr.mxu0 0.0
        %817 = vmatpush1.msra.mxu0 0.0
        %818 = vmatprep.subr.mxu0 0.0
        %819 = vmatpush1.msra.mxu0 0.0
        %820 = vmatprep.subr.mxu0 0.0
        %821 = vmatpush1.msra.mxu0 0.0
        %822 = vmatprep.subr.mxu0 0.0
        %823 = vmatpush1.msra.mxu0 0.0
        %824 = vmatprep.subr.mxu0 0.0
        %825 = vmatpush1.msra.mxu0 0.0
        %826 = vmatprep.subr.mxu0 0.0
        %827 = vmatpush1.msra.mxu0 0.0
        %828 = vmatprep.subr.mxu0 0.0
        %829 = vmatpush1.msra.mxu0 0.0
        %830 = vmatprep.subr.mxu0 0.0
        %831 = vmatpush1.msra.mxu0 0.0
        %832 = vmatprep.subr.mxu0 0.0
        %833 = vmatpush1.msra.mxu0 0.0
        %834 = vmatprep.subr.mxu0 0.0
        %835 = vmatpush1.msra.mxu0 0.0
        %836 = vmatprep.subr.mxu0 0.0
        %837 = vmatpush1.msra.mxu0 0.0
        %838 = vmatprep.mubr.f32.mxu0 0.0
        %839 = vmatmul.mubr.f32.gmra.mrb[0].mxu0 %v765
        %v840 = vpop.f32.mrb[0].mxu0
        %v841 = vadd.f32 0.0, %v840
        %v842 = vpop.f32.mrb[0].mxu0
        %v843 = vadd.f32 0.0, %v842
        %844 = vdwg.mxu0
        %v845 = vsel %vm767, %v841, 0.0
        %v846 = vsel %vm767, %v843, 0.0
        %v847 = vadd.f32 %v845, %v846
        %848 = vadd.xlane.f32.xlu0 %v847
        %v849 = vpop.xlane.xlu0 %848
        %v850 = vrcp.pop 256.0
        %v851 = vmul.f32 %v849, %v850
        %v852 = vxor.u32 %v851, 2147483648
        %v853 = vmul.f32 %v852, 1.442695
        %v854 = vpow.pop %v853
        %v855 = vadd.f32 %v854, 1.0
        %v856 = vrcp.pop %v855
        %v857 = vmul.f32 1.0, %v856
        %v858 = vadd.f32 %v857, 1.0
        %v861 = vunpack.c.l.s4 839922192
        %v862 = vunpack.c.0.s8 %v861
        %v863 = vlaneseq
        %v864 = vshrl.u32 %v863, 7
        %v865 = vsub.s32 %v862, %v864
        %v866 = vrot.slane %v858, %v865
        %v868 = vmul.f32 %v270, %v866
        %v869 = vld [vmem:[%s4] sm:$0xff]
        %v871 = vcombine.high %v868, %v868
        %v873 = vsel %vm763, %v869, 0
        %v875 = vsel %vm767, %v868, 0
        %v877 = vsel %vm767, %v871, 0
        %879 = vmatprep.subr.mxu0 %v877
        %880 = vmatpush1.msra.mxu0 %v875
        %881 = vmatprep.subr.mxu0 0.0
        %882 = vmatpush1.msra.mxu0 0.0
        %883 = vmatprep.subr.mxu0 0.0
        %884 = vmatpush1.msra.mxu0 0.0
        %885 = vmatprep.subr.mxu0 0.0
        %886 = vmatpush1.msra.mxu0 0.0
        %887 = vmatprep.subr.mxu0 0.0
        %888 = vmatpush1.msra.mxu0 0.0
        %889 = vmatprep.subr.mxu0 0.0
        %890 = vmatpush1.msra.mxu0 0.0
        %891 = vmatprep.subr.mxu0 0.0
        %892 = vmatpush1.msra.mxu0 0.0
        %893 = vmatprep.subr.mxu0 0.0
        %894 = vmatpush1.msra.mxu0 0.0
        %895 = vmatprep.subr.mxu0 0.0
        %896 = vmatpush1.msra.mxu0 0.0
        %897 = vmatprep.subr.mxu0 0.0
        %898 = vmatpush1.msra.mxu0 0.0
        %899 = vmatprep.subr.mxu0 0.0
        %900 = vmatpush1.msra.mxu0 0.0
        %901 = vmatprep.subr.mxu0 0.0
        %902 = vmatpush1.msra.mxu0 0.0
        %903 = vmatprep.subr.mxu0 0.0
        %904 = vmatpush1.msra.mxu0 0.0
        %905 = vmatprep.subr.mxu0 0.0
        %906 = vmatpush1.msra.mxu0 0.0
        %907 = vmatprep.subr.mxu0 0.0
        %908 = vmatpush1.msra.mxu0 0.0
        %909 = vmatprep.subr.mxu0 0.0
        %910 = vmatpush1.msra.mxu0 0.0
        %911 = vmatprep.subr.mxu0 0.0
        %912 = vmatpush1.msra.mxu0 0.0
        %913 = vmatprep.subr.mxu0 0.0
        %914 = vmatpush1.msra.mxu0 0.0
        %915 = vmatprep.subr.mxu0 0.0
        %916 = vmatpush1.msra.mxu0 0.0
        %917 = vmatprep.subr.mxu0 0.0
        %918 = vmatpush1.msra.mxu0 0.0
        %919 = vmatprep.subr.mxu0 0.0
        %920 = vmatpush1.msra.mxu0 0.0
        %921 = vmatprep.subr.mxu0 0.0
        %922 = vmatpush1.msra.mxu0 0.0
        %923 = vmatprep.subr.mxu0 0.0
        %924 = vmatpush1.msra.mxu0 0.0
        %925 = vmatprep.subr.mxu0 0.0
        %926 = vmatpush1.msra.mxu0 0.0
        %927 = vmatprep.subr.mxu0 0.0
        %928 = vmatpush1.msra.mxu0 0.0
        %929 = vmatprep.subr.mxu0 0.0
        %930 = vmatpush1.msra.mxu0 0.0
        %931 = vmatprep.subr.mxu0 0.0
        %932 = vmatpush1.msra.mxu0 0.0
        %933 = vmatprep.subr.mxu0 0.0
        %934 = vmatpush1.msra.mxu0 0.0
        %935 = vmatprep.subr.mxu0 0.0
        %936 = vmatpush1.msra.mxu0 0.0
        %937 = vmatprep.subr.mxu0 0.0
        %938 = vmatpush1.msra.mxu0 0.0
        %939 = vmatprep.subr.mxu0 0.0
        %940 = vmatpush1.msra.mxu0 0.0
        %941 = vmatprep.subr.mxu0 0.0
        %942 = vmatpush1.msra.mxu0 0.0
        %943 = vmatprep.mubr.f32.mxu0 0.0
        %944 = vmatmul.mubr.f32.gmra.mrb[0].mxu0 %v873
        %v945 = vpop.f32.mrb[0].mxu0
        %v946 = vadd.f32 0.0, %v945
        %v947 = vpop.f32.mrb[0].mxu0
        %v948 = vadd.f32 0.0, %v947
        %949 = vdwg.mxu0
        %950 = vst [vmem:[%s269] sm:$0xff] %v946
        %951 = vst [vmem:[%s269 + $0x8] sm:$0xff] %v948
        %s952 = sand.u32 %s141, 1
        %s953 = scalar_lea.sflag [#allocation4], %s952
        %s954 = sand.u32 %s141, 1
        %s955 = smul.addr %s954, 16
        %s956 = scalar_lea.vmem [#allocation8], %s955
        // Predicated region
        $region53: #{tpu_custom_call.1} parent=39 // pred_check
          %p957 = pneg %p151
        $region54: #{tpu_custom_call.1} parent=39 // pred_check_branch
          %959 = sbr.rel (%p957) target = $region56
        $region55: #{tpu_custom_call.1} parent=39 // pred_region
          %s961 = ssub.s32 256, 256
          %962 = vsyncadd %s953, %s961
          %s963 = smul.addr %s23, 2
          %s964 = smul.addr %s963, 128
          %s965 = scalar_lea.hbm %s5, %s964
          %s967 = sshll.u32 %s956, 4
          %s968 = int_to_ptr.vmem [resolvable:$true] %s967
          %970 = dma.vmem_to_hbm [thread:$0]  %s968, 256, %s965, %s953
        $region56: #{tpu_custom_call.1} parent=39 // pred_fallthru
          _
      $region40: #{tpu_custom_call.1} parent=5 // pred_fallthru
        _
      %p971 = scmp.le.s32.totalorder 2, %s18
      // Predicated region
      $region57: #{tpu_custom_call.1} parent=5 // pred_check
        %p972 = pneg %p971
      $region58: #{tpu_custom_call.1} parent=5 // pred_check_branch
        %974 = sbr.rel (%p972) target = $region60
      $region59: #{tpu_custom_call.1} parent=5 // pred_region
        %s975 = ssub.s32 %s18, 2
        // Predicated region
        $region61: #{tpu_custom_call.1} parent=59 // pred_check
          %p976 = pneg %p157
        $region62: #{tpu_custom_call.1} parent=59 // pred_check_branch
          %978 = sbr.rel (%p976) target = $region64
        $region63: #{tpu_custom_call.1} parent=59 // pred_region
          %s979 = sand.u32 %s142, 1
          %s980 = scalar_lea.sflag [#allocation4], %s979
          %s981 = sand.u32 %s142, 1
          %s982 = smul.addr %s981, 16
          %s983 = scalar_lea.vmem [#allocation8], %s982
          %984 = dma.done %s980, 256
        $region64: #{tpu_custom_call.1} parent=59 // pred_fallthru
          _
      $region60: #{tpu_custom_call.1} parent=5 // pred_fallthru
        _
    $region6: #{tpu_custom_call.1} parent=1 // loop_footer
      %s22 = sadd.s32 1, %s18
    $region7: #{tpu_custom_call.1} parent=1 // loop_footer_branch
      %17 = sbr.rel target = $region3
    $region8: #{tpu_custom_call.1} parent=1 // loop_exit
      _
    %985 = vsyncpa [#allocation3], 1
    %s986 = scalar_lea.sflag [#allocation3], 1
    %987 = vsyncpa %s986, 1
    %988 = vsyncpa [#allocation6], 1
    %989 = vsyncpa [#allocation4], 1
    %s990 = scalar_lea.sflag [#allocation4], 1
    %991 = vsyncpa %s990, 1

</llo_original>
